<compile_context>
chip_gen: v5e
topology: v5e:2x2
jax: 0.10.0
libtpu: 0.0.40
codegen_flags: <defaults>
</compile_context>

<pallas_src>
import math
import functools

import jax
import jax.numpy as jnp
from jax.experimental import pallas as pl
from jax.experimental.pallas import tpu as pltpu

_HALF_LOG_2PI = 0.5 * math.log(2.0 * math.pi)
_LOG2 = math.log(2.0)


def _policy_kernel(xT_ref, epsT_ref, w1_ref, b1_ref, w2_ref, b2_ref,
                   act_ref, mean_ref, *maybe_lp_ref, max_action, get_logprob):
    A = epsT_ref.shape[0]

    # Hidden layer (MXU: bf16 in, f32 accumulate) + ReLU.     hT: [H, TB]
    hT = jnp.dot(w1_ref[...], xT_ref[...],
                 preferred_element_type=jnp.float32) + b1_ref[...]
    hT = jnp.maximum(hT, 0.0)

    # Fused output head.                                      headT: [2A, TB]
    headT = jnp.dot(w2_ref[...], hT.astype(w2_ref.dtype),
                    preferred_element_type=jnp.float32) + b2_ref[...]

    mu = headT[:A, :]                                  # sublane split, in-kernel
    logstd = jnp.clip(headT[A:, :], -20.0, 2.0)
    std = jnp.exp(logstd)

    eps = epsT_ref[...]
    pre = mu + std * eps                               # rsample before tanh

    act_ref[...] = (jnp.tanh(pre) * max_action).astype(act_ref.dtype)
    mean_ref[...] = (jnp.tanh(mu) * max_action).astype(mean_ref.dtype)

    if get_logprob:
        lp_ref = maybe_lp_ref[0]
        # Normal(mu, std).log_prob(pre): (pre - mu)/std == eps exactly.
        base_lp = -0.5 * eps * eps - logstd - _HALF_LOG_2PI
        # log|d tanh(x)/dx| = 2*(log 2 - x - softplus(-2x))
        log_det = 2.0 * (_LOG2 - pre - jax.nn.softplus(-2.0 * pre))
        lp_ref[...] = jnp.sum(base_lp - log_det, axis=0,
                              keepdims=True).astype(lp_ref.dtype)


def policy_forward(x, eps, params, max_action, get_logprob=False):
    """x: [B, state_dim] f32, eps: [B, action_dim] f32 (standard normal).

    params are PyTorch-Linear-layout: w1 [H, S], b1 [H], w2 [2A, H], b2 [2A].
    Returns (action*max_action, logprob or None, tanh(mu)*max_action),
    matching Policy.forward.
    """
    w1, b1, w2, b2 = params
    B, S = x.shape
    A = eps.shape[1]
    H = w1.shape[0]

    # Feature-major operands; bf16 for the MXU matmuls (halves x HBM traffic
    # and weight VMEM), biases / elementwise stay f32.
    xT = x.T.astype(jnp.bfloat16)                      # [S, B]
    epsT = eps.T.astype(jnp.float32)                   # [A, B]
    w1b = w1.astype(jnp.bfloat16)                      # [H, S]
    w2b = w2.astype(jnp.bfloat16)                      # [2A, H]
    b1c = b1.reshape(H, 1).astype(jnp.float32)
    b2c = b2.reshape(2 * A, 1).astype(jnp.float32)

    # Batch tile = lane axis. Lane-aligned (128) tiles; >=2 grid steps whenever
    # B > 128 so v7x's second TensorCore gets work; up to 8192 rows/tile.
    LANE = 128
    MAX_TB = 8192
    if B <= LANE:
        TB = B                                         # single tile (== full dim)
    else:
        TB = min(MAX_TB, pl.cdiv(pl.cdiv(B, 2), LANE) * LANE)
    grid = (pl.cdiv(B, TB),)

    def batch_tiled(rows):
        return pl.BlockSpec((rows, TB), lambda i: (0, i))

    def resident(shape):                               # VMEM-resident (constant map)
        return pl.BlockSpec(shape, lambda i: (0, 0))

    in_specs = [
        batch_tiled(S),                                # xT
        batch_tiled(A),                                # epsT
        resident(w1b.shape), resident(b1c.shape),
        resident(w2b.shape), resident(b2c.shape),
    ]
    out_shapes = [jax.ShapeDtypeStruct((A, B), jnp.float32),     # action^T
                  jax.ShapeDtypeStruct((A, B), jnp.float32)]     # mean^T
    out_specs = [batch_tiled(A), batch_tiled(A)]
    if get_logprob:
        out_shapes.append(jax.ShapeDtypeStruct((1, B), jnp.float32))
        out_specs.append(batch_tiled(1))

    # VMEM budget: 2x (double-buffer) tiled I/O and resident weights,
    # f32 intermediates (hT, headT, std/pre/... temporaries), small headroom.
    n_out_rows = 2 * A + (1 if get_logprob else 0)
    tile_io = TB * (2 * S + 4 * A) + TB * 4 * n_out_rows
    weight_bytes = 2 * (H * S + 2 * A * H) + 4 * (H + 2 * A)
    interm = TB * 4 * (H + 6 * A)
    vmem_bytes = 2 * (tile_io + weight_bytes) + 2 * interm + (2 << 20)
    vmem_bytes = int(min(max(vmem_bytes, 4 << 20), 32 << 20))

    kernel = functools.partial(_policy_kernel,
                               max_action=float(max_action),
                               get_logprob=get_logprob)

    outs = pl.pallas_call(
        kernel,
        grid=grid,
        out_shape=tuple(out_shapes),
        in_specs=in_specs,
        out_specs=tuple(out_specs),
        compiler_params=pltpu.CompilerParams(
            dimension_semantics=("parallel",),
            vmem_limit_bytes=vmem_bytes),
    )(xT, epsT, w1b, b1c, w2b, b2c)

    # Kernel outputs are feature-major; transpose back to the PyTorch API
    # ([B, A] / [B, 1]).  These are tiny (A-row) XLA transposes; consumers
    # that accept feature-major tensors can use `outs` directly and skip them.
    action = outs[0].T
    mean = outs[1].T
    logprob = outs[2].T if get_logprob else None
    return action, logprob, mean


def _policy_reference(x, eps, params, max_action):
    """Pure-JAX reference of Policy.forward with the same bf16 matmul rounding."""
    w1, b1, w2, b2 = params
    A = eps.shape[1]
    x_b = x.astype(jnp.bfloat16)
    w1_b = w1.astype(jnp.bfloat16)
    w2_b = w2.astype(jnp.bfloat16)
    h = jnp.dot(x_b, w1_b.T, preferred_element_type=jnp.float32) + b1[None, :]
    h = jnp.maximum(h, 0.0)
    out = jnp.dot(h.astype(jnp.bfloat16), w2_b.T,
                  preferred_element_type=jnp.float32) + b2[None, :]
    mu, logstd = out[:, :A], jnp.clip(out[:, A:], -20.0, 2.0)
    std = jnp.exp(logstd)
    pre = mu + std * eps
    action = jnp.tanh(pre) * max_action
    mean = jnp.tanh(mu) * max_action
    base_lp = -0.5 * jnp.square(eps) - logstd - _HALF_LOG_2PI
    log_det = 2.0 * (_LOG2 - pre - jax.nn.softplus(-2.0 * pre))
    logprob = jnp.sum(base_lp - log_det, axis=-1, keepdims=True)
    return action, logprob, mean


def init_params(key, state_dim, action_dim, hidden_size):
    """PyTorch-Linear-style init, PyTorch weight layout W:[out, in], b:[out]."""
    k1, k2, k3, k4 = jax.random.split(key, 4)
    out_dim = 2 * action_dim
    b1_bound = 1.0 / math.sqrt(state_dim)
    b2_bound = 1.0 / math.sqrt(hidden_size)
    w1 = jax.random.uniform(k1, (hidden_size, state_dim), jnp.float32,
                            -b1_bound, b1_bound)
    b1 = jax.random.uniform(k2, (hidden_size,), jnp.float32, -b1_bound, b1_bound)
    w2 = jax.random.uniform(k3, (out_dim, hidden_size), jnp.float32,
                            -b2_bound, b2_bound)
    b2 = jax.random.uniform(k4, (out_dim,), jnp.float32, -b2_bound, b2_bound)
    return w1, b1, w2, b2


def _check(batch, params, max_action, key):
    state_dim = params[0].shape[1]
    action_dim = params[2].shape[0] // 2
    k_x, k_eps = jax.random.split(key)
    x = jax.random.normal(k_x, (batch, state_dim), jnp.float32)
    eps = jax.random.normal(k_eps, (batch, action_dim), jnp.float32)

    # Default path: logprob not computed at all inside the kernel.
    action, logprob, mean = policy_forward(x, eps, params, max_action,
                                           get_logprob=False)
    jax.block_until_ready((action, mean))
    assert logprob is None
    assert action.shape == (batch, action_dim)
    assert mean.shape == (batch, action_dim)

    # Logprob path.
    action, logprob, mean = policy_forward(x, eps, params, max_action,
                                           get_logprob=True)
    jax.block_until_ready((action, logprob, mean))
    assert logprob.shape == (batch, 1)

    ref_action, ref_logprob, ref_mean = _policy_reference(x, eps, params,
                                                          max_action)
    assert jnp.allclose(action, ref_action, atol=1e-3, rtol=1e-3)
    assert jnp.allclose(mean, ref_mean, atol=1e-3, rtol=1e-3)
    assert jnp.allclose(logprob, ref_logprob, atol=1e-3, rtol=1e-3)


if __name__ == "__main__":
    state_dim = 16
    action_dim = 4
    hidden_size = 32
    max_action = 2.0

    key = jax.random.PRNGKey(0)
    k_params, k1, k2 = jax.random.split(key, 3)
    params = init_params(k_params, state_dim, action_dim, hidden_size)

    _check(batch=8, params=params, max_action=max_action, key=k1)     # single tile
    _check(batch=256, params=params, max_action=max_action, key=k2)   # 2-step grid

    print("KERNEL_OK")
</pallas_src>

<mosaic_0001>
module attributes {stable_mosaic.version = 11 : i64} {
  func.func @_policy_kernel(%arg0: i32, %arg1: memref<16x8xbf16, #tpu.memory_space<vmem>>, %arg2: memref<4x8xf32, #tpu.memory_space<vmem>>, %arg3: memref<32x16xbf16, #tpu.memory_space<vmem>>, %arg4: memref<32x1xf32, #tpu.memory_space<vmem>>, %arg5: memref<8x32xbf16, #tpu.memory_space<vmem>>, %arg6: memref<8x1xf32, #tpu.memory_space<vmem>>, %arg7: memref<4x8xf32, #tpu.memory_space<vmem>>, %arg8: memref<4x8xf32, #tpu.memory_space<vmem>>) attributes {dimension_semantics = [#tpu.dimension_semantics<parallel>], iteration_bounds = array<i64: 1>, scalar_prefetch = 0 : i64, scratch_operands = 0 : i64, tpu.core_type = #tpu.core_type<tc>, window_params = [{transform_indices = @transform_0, window_bounds = array<i64: 16, 8>}, {transform_indices = @transform_1, window_bounds = array<i64: 4, 8>}, {pipeline_mode = #tpu.pipeline_mode<synchronous>, transform_indices = @transform_2, window_bounds = array<i64: 32, 16>}, {pipeline_mode = #tpu.pipeline_mode<synchronous>, transform_indices = @transform_3, window_bounds = array<i64: 32, 1>}, {pipeline_mode = #tpu.pipeline_mode<synchronous>, transform_indices = @transform_4, window_bounds = array<i64: 8, 32>}, {pipeline_mode = #tpu.pipeline_mode<synchronous>, transform_indices = @transform_5, window_bounds = array<i64: 8, 1>}, {transform_indices = @transform_6, window_bounds = array<i64: 4, 8>}, {transform_indices = @transform_7, window_bounds = array<i64: 4, 8>}]} {
    %c0 = arith.constant 0 : index
    %c0_0 = arith.constant 0 : index
    %0 = vector.load %arg3[%c0, %c0_0] : memref<32x16xbf16, #tpu.memory_space<vmem>>, vector<32x16xbf16>
    %c0_1 = arith.constant 0 : index
    %c0_2 = arith.constant 0 : index
    %1 = vector.load %arg1[%c0_1, %c0_2] : memref<16x8xbf16, #tpu.memory_space<vmem>>, vector<16x8xbf16>
    %cst = arith.constant dense<0.000000e+00> : vector<32x8xf32>
    %2 = tpu.matmul %0, %1, %cst {dimension_numbers = #tpu.dot_dimension_numbers<[1], [0], [0], [1], [0, 0, 1, 1], [], []>} : vector<32x16xbf16>, vector<16x8xbf16>, vector<32x8xf32> -> vector<32x8xf32>
    %c0_3 = arith.constant 0 : index
    %c0_4 = arith.constant 0 : index
    %3 = vector.load %arg4[%c0_3, %c0_4] : memref<32x1xf32, #tpu.memory_space<vmem>>, vector<32x1xf32>
    %4 = vector.broadcast %3 : vector<32x1xf32> to vector<32x8xf32>
    %5 = arith.addf %2, %4 : vector<32x8xf32>
    %cst_5 = arith.constant 0.000000e+00 : f32
    %6 = vector.broadcast %cst_5 : f32 to vector<32x8xf32>
    %7 = arith.maximumf %5, %6 : vector<32x8xf32>
    %c0_6 = arith.constant 0 : index
    %c0_7 = arith.constant 0 : index
    %8 = vector.load %arg5[%c0_6, %c0_7] : memref<8x32xbf16, #tpu.memory_space<vmem>>, vector<8x32xbf16>
    %9 = arith.truncf %7 : vector<32x8xf32> to vector<32x8xbf16>
    %cst_8 = arith.constant dense<0.000000e+00> : vector<8x8xf32>
    %10 = tpu.matmul %8, %9, %cst_8 {dimension_numbers = #tpu.dot_dimension_numbers<[1], [0], [0], [1], [0, 0, 1, 1], [], []>} : vector<8x32xbf16>, vector<32x8xbf16>, vector<8x8xf32> -> vector<8x8xf32>
    %c0_9 = arith.constant 0 : index
    %c0_10 = arith.constant 0 : index
    %11 = vector.load %arg6[%c0_9, %c0_10] : memref<8x1xf32, #tpu.memory_space<vmem>>, vector<8x1xf32>
    %12 = vector.broadcast %11 : vector<8x1xf32> to vector<8x8xf32>
    %13 = arith.addf %10, %12 : vector<8x8xf32>
    %14 = vector.extract_strided_slice %13 {offsets = [0, 0], sizes = [4, 8], strides = [1, 1]} : vector<8x8xf32> to vector<4x8xf32>
    %15 = vector.extract_strided_slice %13 {offsets = [4, 0], sizes = [4, 8], strides = [1, 1]} : vector<8x8xf32> to vector<4x8xf32>
    %cst_11 = arith.constant -2.000000e+01 : f32
    %cst_12 = arith.constant 2.000000e+00 : f32
    %16 = vector.broadcast %cst_11 : f32 to vector<4x8xf32>
    %17 = arith.maximumf %16, %15 : vector<4x8xf32>
    %18 = vector.broadcast %cst_12 : f32 to vector<4x8xf32>
    %19 = arith.minimumf %18, %17 : vector<4x8xf32>
    %20 = math.exp %19 : vector<4x8xf32>
    %c0_13 = arith.constant 0 : index
    %c0_14 = arith.constant 0 : index
    %21 = vector.load %arg2[%c0_13, %c0_14] : memref<4x8xf32, #tpu.memory_space<vmem>>, vector<4x8xf32>
    %22 = arith.mulf %20, %21 : vector<4x8xf32>
    %23 = arith.addf %14, %22 : vector<4x8xf32>
    %24 = math.tanh %23 : vector<4x8xf32>
    %cst_15 = arith.constant 2.000000e+00 : f32
    %25 = vector.broadcast %cst_15 : f32 to vector<4x8xf32>
    %26 = arith.mulf %24, %25 : vector<4x8xf32>
    %c0_16 = arith.constant 0 : index
    %c0_17 = arith.constant 0 : index
    %27 = vector.load %arg7[%c0_16, %c0_17] : memref<4x8xf32, #tpu.memory_space<vmem>>, vector<4x8xf32>
    tpu.vector_store %arg7[%c0_16, %c0_17], %26 {strides = array<i32>} : memref<4x8xf32, #tpu.memory_space<vmem>>, vector<4x8xf32>,
    %28 = math.tanh %14 : vector<4x8xf32>
    %cst_18 = arith.constant 2.000000e+00 : f32
    %29 = vector.broadcast %cst_18 : f32 to vector<4x8xf32>
    %30 = arith.mulf %28, %29 : vector<4x8xf32>
    %c0_19 = arith.constant 0 : index
    %c0_20 = arith.constant 0 : index
    %31 = vector.load %arg8[%c0_19, %c0_20] : memref<4x8xf32, #tpu.memory_space<vmem>>, vector<4x8xf32>
    tpu.vector_store %arg8[%c0_19, %c0_20], %30 {strides = array<i32>} : memref<4x8xf32, #tpu.memory_space<vmem>>, vector<4x8xf32>,
    return
  }
  func.func @transform_0(%arg0: i32) -> (i32, i32) {
    %c0_i32 = arith.constant 0 : i32
    %c0_i32_0 = arith.constant 0 : i32
    return %c0_i32, %arg0 : i32, i32
  }
  func.func @transform_1(%arg0: i32) -> (i32, i32) {
    %c0_i32 = arith.constant 0 : i32
    %c0_i32_0 = arith.constant 0 : i32
    return %c0_i32, %arg0 : i32, i32
  }
  func.func @transform_2(%arg0: i32) -> (i32, i32) {
    %c0_i32 = arith.constant 0 : i32
    %c0_i32_0 = arith.constant 0 : i32
    %c0_i32_1 = arith.constant 0 : i32
    return %c0_i32, %c0_i32_0 : i32, i32
  }
  func.func @transform_3(%arg0: i32) -> (i32, i32) {
    %c0_i32 = arith.constant 0 : i32
    %c0_i32_0 = arith.constant 0 : i32
    %c0_i32_1 = arith.constant 0 : i32
    return %c0_i32, %c0_i32_0 : i32, i32
  }
  func.func @transform_4(%arg0: i32) -> (i32, i32) {
    %c0_i32 = arith.constant 0 : i32
    %c0_i32_0 = arith.constant 0 : i32
    %c0_i32_1 = arith.constant 0 : i32
    return %c0_i32, %c0_i32_0 : i32, i32
  }
  func.func @transform_5(%arg0: i32) -> (i32, i32) {
    %c0_i32 = arith.constant 0 : i32
    %c0_i32_0 = arith.constant 0 : i32
    %c0_i32_1 = arith.constant 0 : i32
    return %c0_i32, %c0_i32_0 : i32, i32
  }
  func.func @transform_6(%arg0: i32) -> (i32, i32) {
    %c0_i32 = arith.constant 0 : i32
    %c0_i32_0 = arith.constant 0 : i32
    return %c0_i32, %arg0 : i32, i32
  }
  func.func @transform_7(%arg0: i32) -> (i32, i32) {
    %c0_i32 = arith.constant 0 : i32
    %c0_i32_0 = arith.constant 0 : i32
    return %c0_i32, %arg0 : i32, i32
  }
}

</mosaic_0001>

<llo_original>
// kernel: tpu_custom_call.1
$region0: #{tpu_custom_call.1}
  #allocation0 [shape = 'u32[]', space=smem, size = 0x4, offset = 0x4, fixed_abs, tag = 'smem constant byte address 0x4 - core index']
  #allocation1 [shape = 'u32[72,128]{1,0:T(1,128)}', space=vmem, size = 0x9000, scoped, tag = 'internal scratch']
  %s0 = inlined_call_operand.vmem [shape: bf16[16,8], index: 0, kind: input, shape index: {}]
  %s1 = inlined_call_operand.vmem [shape: f32[4,8], index: 1, kind: input, shape index: {}]
  %s2 = inlined_call_operand.vmem [shape: bf16[32,16], index: 2, kind: input, shape index: {}]
  %s3 = inlined_call_operand.vmem [shape: f32[32,1], index: 3, kind: input, shape index: {}]
  %s4 = inlined_call_operand.vmem [shape: bf16[8,32], index: 4, kind: input, shape index: {}]
  %s5 = inlined_call_operand.vmem [shape: f32[8,1], index: 5, kind: input, shape index: {}]
  %s6 = inlined_call_operand.hbm [shape: f32[4,8], index: 6, kind: output, shape index: {0}]
  %s7 = inlined_call_operand.hbm [shape: f32[4,8], index: 7, kind: output, shape index: {1}]
  %8 = xla_tuple %s6, %s7
  %s9 = sld [smem:[#allocation0]]
  $region42: #{tpu_custom_call.1} parent=0
    _
  %s11 = ssub.s32 1, %s9
  %s12 = scalar_select 0, %s11, %s9
  $region1: #{tpu_custom_call.1} parent=0
    #allocation2 [shape = 'u8[2048]{0}', space=vmem, size = 0x800, scoped, tag = 'output window, operand 0, single buffered']
    #allocation3 [shape = 's32[1]{0}', space=sflag, size = 0x4, scoped, tag = 'scoped memory for tpu_custom_call.1']
    #allocation4 [shape = 'u8[2048]{0}', space=vmem, size = 0x800, scoped, tag = 'output window, operand 1, single buffered']
    #allocation5 [shape = 's32[1]{0}', space=sflag, size = 0x4, scoped, tag = 'scoped memory for tpu_custom_call.1']
    %13 = vsyncpa [#allocation3], 0
    %14 = vsyncpa [#allocation5], 0
    // Predicated region
    $region2: #{tpu_custom_call.1} parent=1 // pred_check
      _
    $region3: #{tpu_custom_call.1} parent=1 // pred_check_branch
      %16 = sbr.rel (0) target = $region5
    $region4: #{tpu_custom_call.1} parent=1 // pred_region
      _
    $region5: #{tpu_custom_call.1} parent=1 // pred_fallthru
      _
    // Predicated region
    $region6: #{tpu_custom_call.1} parent=1 // pred_check
      _
    $region7: #{tpu_custom_call.1} parent=1 // pred_check_branch
      %18 = sbr.rel (0) target = $region9
    $region8: #{tpu_custom_call.1} parent=1 // pred_region
      _
    $region9: #{tpu_custom_call.1} parent=1 // pred_fallthru
      _
    // Predicated region
    $region10: #{tpu_custom_call.1} parent=1 // pred_check
      _
    $region11: #{tpu_custom_call.1} parent=1 // pred_check_branch
      %20 = sbr.rel (0) target = $region13
    $region12: #{tpu_custom_call.1} parent=1 // pred_region
      _
    $region13: #{tpu_custom_call.1} parent=1 // pred_fallthru
      _
    // Predicated region
    $region14: #{tpu_custom_call.1} parent=1 // pred_check
      _
    $region15: #{tpu_custom_call.1} parent=1 // pred_check_branch
      %22 = sbr.rel (0) target = $region17
    $region16: #{tpu_custom_call.1} parent=1 // pred_region
      _
    $region17: #{tpu_custom_call.1} parent=1 // pred_fallthru
      _
    // Predicated region
    $region18: #{tpu_custom_call.1} parent=1 // pred_check
      _
    $region19: #{tpu_custom_call.1} parent=1 // pred_check_branch
      %24 = sbr.rel (0) target = $region21
    $region20: #{tpu_custom_call.1} parent=1 // pred_region
      _
    $region21: #{tpu_custom_call.1} parent=1 // pred_fallthru
      _
    // Predicated region
    $region22: #{tpu_custom_call.1} parent=1 // pred_check
      _
    $region23: #{tpu_custom_call.1} parent=1 // pred_check_branch
      %26 = sbr.rel (0) target = $region25
    $region24: #{tpu_custom_call.1} parent=1 // pred_region
      _
    $region25: #{tpu_custom_call.1} parent=1 // pred_fallthru
      _
    %v28 = vld [vmem:[%s2] sm:$0xf]
    %v29 = vld [vmem:[%s2 + $0x4] sm:$0xf]
    %v30 = vld [vmem:[%s2 + $0x8] sm:$0xf]
    %v31 = vld [vmem:[%s2 + $0xc] sm:$0xf]
    %v32 = vld [vmem:[%s0] sm:$0xf]
    %v33 = vld [vmem:[%s0 + $0x4] sm:$0xf]
    %v34 = vld [vmem:[%s3] sm:$0xff]
    %v35 = vld [vmem:[%s3 + $0x8] sm:$0xff]
    %v36 = vld [vmem:[%s3 + $0x10] sm:$0xff]
    %v37 = vld [vmem:[%s3 + $0x18] sm:$0xff]
    %39 = vset.pattern.permute.xlu0 0
    %40 = vperm.xlu0 %39, %v34
    %v41 = vpop.permute.xlu0 %40
    %44 = vset.pattern.permute.xlu0 0
    %45 = vperm.xlu0 %44, %v35
    %v46 = vpop.permute.xlu0 %45
    %49 = vset.pattern.permute.xlu0 0
    %50 = vperm.xlu0 %49, %v36
    %v51 = vpop.permute.xlu0 %50
    %54 = vset.pattern.permute.xlu0 0
    %55 = vperm.xlu0 %54, %v37
    %v56 = vpop.permute.xlu0 %55
    %v62 = vunpack.c.l.b16 %v28
    %v63 = vunpack.c.l.b16 %v29
    %v64 = vunpack.c.l.b16 %v30
    %v65 = vunpack.c.l.b16 %v31
    %v66 = vpack.c.b16 %v63, %v62
    %v67 = vpack.c.b16 %v65, %v64
    %v70 = vunpack.c.l.b16 %v32
    %v71 = vunpack.c.l.b16 %v33
    %v72 = vpack.c.b16 %v71, %v70
    %vm74 = vcmask 130048
    %v76 = vsel %vm74, %v66, 0
    %v79 = vsel %vm74, %v67, 0
    %81 = vmatpush.bf16.msra.mxu0 0
    %82 = vmatpush.bf16.msra.mxu0 0
    %83 = vmatpush.bf16.msra.mxu0 0
    %84 = vmatpush.bf16.msra.mxu0 0
    %85 = vmatpush.bf16.msra.mxu0 0
    %86 = vmatpush.bf16.msra.mxu0 0
    %87 = vmatpush.bf16.msra.mxu0 0
    %88 = vmatpush.bf16.msra.mxu0 %v72
    %89 = vmatmul.bf16.gmra.mxu0 %v76
    %v90 = vpop.f32.mrf.mxu0
    %v91 = vadd.f32 %v41, %v90
    %v92 = vpop.f32.mrf.mxu0
    %v93 = vadd.f32 %v46, %v92
    %94 = vmatmul.bf16.gmra.mxu0 %v79
    %v95 = vpop.f32.mrf.mxu0
    %v96 = vadd.f32 %v51, %v95
    %v97 = vpop.f32.mrf.mxu0
    %v98 = vadd.f32 %v56, %v97
    %99 = vdwg.mxu0
    %v100 = vmax.f32 %v91, 0.0
    %v101 = vmax.f32 %v93, 0.0
    %v102 = vmax.f32 %v96, 0.0
    %v103 = vmax.f32 %v98, 0.0
    %v104 = vld [vmem:[%s4] sm:$0xf]
    %v105 = vpack.c.bf16 %v101, %v100
    %v106 = vpack.c.bf16 %v103, %v102
    %v107 = vld [vmem:[%s5] sm:$0xff]
    %109 = vset.pattern.permute.xlu0 0
    %110 = vperm.xlu0 %109, %v107
    %v111 = vpop.permute.xlu0 %110
    %vm113 = vcmask 261120
    %v115 = vsel %vm113, %v104, 0
    %117 = vmatpush.bf16.msra.mxu0 0
    %118 = vmatpush.bf16.msra.mxu0 0
    %119 = vmatpush.bf16.msra.mxu0 0
    %120 = vmatpush.bf16.msra.mxu0 0
    %121 = vmatpush.bf16.msra.mxu0 0
    %122 = vmatpush.bf16.msra.mxu0 0
    %123 = vmatpush.bf16.msra.mxu0 %v106
    %124 = vmatpush.bf16.msra.mxu0 %v105
    %125 = vmatmul.bf16.gmra.mxu0 %v115
    %v126 = vpop.f32.mrf.mxu0
    %v127 = vadd.f32 %v111, %v126
    %v128 = vpop.f32.mrf.mxu0
    %129 = vdwg.mxu0
    %v130 = vmax.f32 %v127, -20.0
    %v131 = vmin.f32 %v130, 2.0
    %v132 = vmul.f32 %v131, 1.442695
    %v133 = vpow.pop %v132
    %v134 = vld [vmem:[%s1] sm:$0xf]
    %v136 = vrot.slane %v134, 4
    %v138 = vmul.f32 %v133, %v136
    %v140 = vrot.slane %v138, 4
    %v142 = vadd.f32 %v127, %v140
    %v143 = vtanh.pop %v142
    %v144 = vmul.f32 %v143, 2.0
    %vm145 = vcmask 60416
    %146 = vst.msk [vmem:[#allocation2] sm:$0xf] %vm145, %v144
    %v147 = vtanh.pop %v127
    %v148 = vmul.f32 %v147, 2.0
    %149 = vst.msk [vmem:[#allocation4] sm:$0xf] %vm145, %v148
    // Predicated region
    $region26: #{tpu_custom_call.1} parent=1 // pred_check
      _
    $region27: #{tpu_custom_call.1} parent=1 // pred_check_branch
      %151 = sbr.rel (0) target = $region29
    $region28: #{tpu_custom_call.1} parent=1 // pred_region
      %153 = vsyncadd [#allocation3], 0
      %s155 = sshll.u32 [#allocation2], 4
      %s156 = int_to_ptr.vmem [resolvable:$true] %s155
      %s157 = sshll.u32 %s6, 4
      %s158 = int_to_ptr.hbm [resolvable:$true] %s157
      %160 = dma.vmem_to_hbm [thread:$0]  %s156, 64, %s158, [#allocation3]
    $region29: #{tpu_custom_call.1} parent=1 // pred_fallthru
      _
    // Predicated region
    $region30: #{tpu_custom_call.1} parent=1 // pred_check
      _
    $region31: #{tpu_custom_call.1} parent=1 // pred_check_branch
      %162 = sbr.rel (0) target = $region33
    $region32: #{tpu_custom_call.1} parent=1 // pred_region
      %164 = vsyncadd [#allocation5], 0
      %s166 = sshll.u32 [#allocation4], 4
      %s167 = int_to_ptr.vmem [resolvable:$true] %s166
      %s168 = sshll.u32 %s7, 4
      %s169 = int_to_ptr.hbm [resolvable:$true] %s168
      %171 = dma.vmem_to_hbm [thread:$0]  %s167, 64, %s169, [#allocation5]
    $region33: #{tpu_custom_call.1} parent=1 // pred_fallthru
      _
    // Predicated region
    $region34: #{tpu_custom_call.1} parent=1 // pred_check
      _
    $region35: #{tpu_custom_call.1} parent=1 // pred_check_branch
      %173 = sbr.rel (0) target = $region37
    $region36: #{tpu_custom_call.1} parent=1 // pred_region
      %175 = dma.done [#allocation3], 64
    $region37: #{tpu_custom_call.1} parent=1 // pred_fallthru
      _
    // Predicated region
    $region38: #{tpu_custom_call.1} parent=1 // pred_check
      _
    $region39: #{tpu_custom_call.1} parent=1 // pred_check_branch
      %177 = sbr.rel (0) target = $region41
    $region40: #{tpu_custom_call.1} parent=1 // pred_region
      %179 = dma.done [#allocation5], 64
    $region41: #{tpu_custom_call.1} parent=1 // pred_fallthru
      _
    %180 = vsyncpa [#allocation3], 1
    %181 = vsyncpa [#allocation5], 1

</llo_original>
